<compile_context>
chip_gen: v7x
topology: tpu7x:2x2x1
jax: 0.10.0
libtpu: 0.0.40
codegen_flags: <defaults>
</compile_context>

<pallas_src>
import functools

import jax
import jax.numpy as jnp
from jax.experimental import pallas as pl
from jax.experimental.pallas import tpu as pltpu

_SUB = 8                    # f32 sublane tile
_LANE = 128                 # lane width
_MAX_BLOCK_ROWS = 2048      # (2048, 128) f32 = 1 MiB per input block
_MIN_KERNEL_ELEMS = _SUB * _LANE   # below this, pure-JAX path


def _cdiv(a, b):
    return -(-a // b)


def _round_up(a, m):
    return _cdiv(a, m) * m


def _sublane_multiple(dtype):
    """Sublane packing requirement for a dtype: 8 / 16 / 32 for 32/16/8-bit."""
    bits = jnp.dtype(dtype).itemsize * 8
    return max(_SUB, 256 // max(bits, 8))


def _wbce_stats_kernel(pred_ref, label_ref, acc_ref, *,
                       block_rows, blocks_per_split, nblk_total,
                       tail_valid, need_tail_mask, binary_labels):
    """Accumulate weighted-BCE statistics into acc_ref (5, 8, 128).

      [0] count of valid elements with label == 1
      [1] count of valid elements with label == 0          (general path only)
      [2] sum of log(pred)     over label == 1 elements    (clamped at -100)
      [3] sum of log(1 - pred) over label == 0 elements    (clamped at -100)
      [4] sum of label*(label*log(p)+(1-label)*log(1-p)) over "other" labels
          (general path only; PyTorch leaves weight == label value there)

    Signs are folded into the wrapper recombination (saves a negate/element).
    Each stat is an (8, 128) per-lane partial; the single cross-lane reduce
    runs once in the JAX wrapper.
    """
    i = pl.program_id(0)      # "parallel" split (both TensorCores on v7x)
    j = pl.program_id(1)      # sequential reduction axis
    linear = i * blocks_per_split + j
    last = nblk_total - 1

    @pl.when(j == 0)
    def _init():
        acc_ref[...] = jnp.zeros_like(acc_ref)

    def fold(x):
        # (block_rows, 128) -> (8, 128): pure vreg-wise VPU adds, no XLU.
        return jnp.sum(x.reshape(block_rows // _SUB, _SUB, _LANE), axis=0)

    def body(masked):
        pred = pred_ref[...].astype(jnp.float32)
        if binary_labels:
            label = label_ref[...].astype(jnp.float32)
        else:
            # PyTorch: label.long() then .float() -> truncate toward zero.
            label = label_ref[...].astype(jnp.int32).astype(jnp.float32)

        if masked:
            # Only the last block: mask the ragged tail / implicit partial
            # block padding.  where-clamp BEFORE the logs so garbage never
            # reaches the EUP (a bare `mask * log(garbage)` would give NaN*0).
            row_ids = jax.lax.broadcasted_iota(jnp.int32, (block_rows, _LANE), 0)
            lane_ids = jax.lax.broadcasted_iota(jnp.int32, (block_rows, _LANE), 1)
            valid = (row_ids * _LANE + lane_ids) < tail_valid
            valid_f = valid.astype(jnp.float32)
            pred = jnp.where(valid, pred, 0.5)
            label = jnp.where(valid, label, 0.0)
            is_pos = (label == 1.0).astype(jnp.float32)   # invalid -> label 0
            if binary_labels:
                is_neg = valid_f - is_pos
                is_other = None
            else:
                is_neg = jnp.where(label == 0.0, valid_f, 0.0)
                is_other = (valid_f - is_pos) - is_neg
        else:
            is_pos = (label == 1.0).astype(jnp.float32)
            if binary_labels:
                is_neg = 1.0 - is_pos
                is_other = None
            else:
                is_neg = (label == 0.0).astype(jnp.float32)
                is_other = (1.0 - is_pos) - is_neg

        # PyTorch F.binary_cross_entropy clamps the log terms at -100.
        log_p = jnp.maximum(jnp.log(pred), -100.0)
        log_1mp = jnp.maximum(jnp.log(1.0 - pred), -100.0)

        acc_ref[0, :, :] += fold(is_pos)
        acc_ref[2, :, :] += fold(is_pos * log_p)
        acc_ref[3, :, :] += fold(is_neg * log_1mp)
        if not binary_labels:
            acc_ref[1, :, :] += fold(is_neg)
            acc_ref[4, :, :] += fold(
                (is_other * label) * (label * log_p + (1.0 - label) * log_1mp))

    if need_tail_mask:
        @pl.when(linear < last)
        def _fast():
            body(masked=False)

        @pl.when(linear == last)
        def _tail():
            body(masked=True)
    else:
        @pl.when(linear <= last)          # skips the odd-nblk duplicate step
        def _all():
            body(masked=False)


def _weighted_edge_loss_ref(pred, label, beta_1=1.0, beta_2=1.0):
    """Pure-JAX reference mirroring the PyTorch module (also tiny-input path)."""
    label_l = label.astype(jnp.int32).astype(jnp.float32)
    pred_f = pred.astype(jnp.float32)
    num_pos = jnp.sum((label_l == 1.0).astype(jnp.float32))
    num_neg = jnp.sum((label_l == 0.0).astype(jnp.float32))
    denom = num_pos + num_neg
    mask = label_l
    mask = jnp.where(label_l == 1.0, beta_1 * num_neg / denom, mask)
    mask = jnp.where(label_l == 0.0, beta_2 * num_pos / denom, mask)
    log_p = jnp.maximum(jnp.log(pred_f), -100.0)
    log_1mp = jnp.maximum(jnp.log(1.0 - pred_f), -100.0)
    bce = -(label_l * log_p + (1.0 - label_l) * log_1mp)
    return jnp.sum(mask * bce) / denom


@functools.partial(jax.jit, static_argnames=("beta_1", "beta_2", "binary_labels"))
def weighted_edge_loss(pred, label, beta_1=1.0, beta_2=1.0, binary_labels=False):
    """JAX/Pallas equivalent of the PyTorch weighted_edge_loss.forward."""
    total = pred.size  # static under jit

    # A handful of vregs is not worth a kernel launch + pipeline warmup.
    if total < _MIN_KERNEL_ELEMS:
        return _weighted_edge_loss_ref(pred, label, beta_1, beta_2)

    # Native dtypes streamed straight to the kernel (no wrapper astype pass).
    pred_flat = pred.reshape(-1)
    label_flat = label.reshape(-1)

    rows = _cdiv(total, _LANE)
    rem = total % _LANE
    if rem:
        # Rare misaligned case: pad only up to the next 128 boundary so the
        # 2-D reshape is legal; the pad values are masked in-kernel.
        # TODO(synk): a 1-D BlockSpec path would avoid this one flat copy too.
        pad = _LANE - rem
        pred_flat = jnp.pad(pred_flat, (0, pad))
        label_flat = jnp.pad(label_flat, (0, pad))

    pred2d = pred_flat.reshape(rows, _LANE)
    label2d = label_flat.reshape(rows, _LANE)

    sub_req = max(_sublane_multiple(pred2d.dtype), _sublane_multiple(label2d.dtype))
    block_rows = min(_MAX_BLOCK_ROWS, _round_up(rows, sub_req))
    nblk_total = _cdiv(rows, block_rows)
    n_split = 2 if nblk_total >= 2 else 1   # both v7x TCs; harmless on 1-TC chips
    blocks_per_split = _cdiv(nblk_total, n_split)
    tail_valid = total - (nblk_total - 1) * block_rows * _LANE
    need_tail_mask = total != nblk_total * block_rows * _LANE

    kernel = functools.partial(
        _wbce_stats_kernel,
        block_rows=block_rows,
        blocks_per_split=blocks_per_split,
        nblk_total=nblk_total,
        tail_valid=tail_valid,
        need_tail_mask=need_tail_mask,
        binary_labels=binary_labels,
    )

    def in_index_map(i, j):
        # Clamp so the odd-nblk duplicate step never issues an OOB block DMA.
        # The duplicate maps to the same block as its predecessor (re-fetch is
        # skipped) and its compute is skipped by pl.when in the kernel.
        return (jnp.minimum(i * blocks_per_split + j, nblk_total - 1), 0)

    in_spec = pl.BlockSpec((block_rows, _LANE), in_index_map)

    bytes_in = (pred2d.size * pred2d.dtype.itemsize
                + label2d.size * label2d.dtype.itemsize)
    acc = pl.pallas_call(
        kernel,
        out_shape=jax.ShapeDtypeStruct((n_split, 5, _SUB, _LANE), jnp.float32),
        grid=(n_split, blocks_per_split),
        in_specs=[in_spec, in_spec],
        out_specs=pl.BlockSpec((None, 5, _SUB, _LANE), lambda i, j: (i, 0, 0, 0)),
        compiler_params=pltpu.CompilerParams(
            dimension_semantics=("parallel", "arbitrary"),
            vmem_limit_bytes=32 * 1024 * 1024,
        ),
        cost_estimate=pl.CostEstimate(
            flops=22 * total,
            transcendentals=2 * total,
            bytes_accessed=bytes_in + n_split * 5 * _SUB * _LANE * 4,
        ),
    )(pred2d, label2d)

    # Tiny final cross-lane reduction + class-weight recombination in JAX.
    stats = jnp.sum(acc, axis=(0, 2, 3))
    num_pos = stats[0]
    if binary_labels:
        num_neg = jnp.float32(total) - num_pos
    else:
        num_neg = stats[1]
    denom = num_pos + num_neg
    w_pos = beta_1 * num_neg / denom     # weight where label == 1
    w_neg = beta_2 * num_pos / denom     # weight where label == 0
    loss = -(w_pos * stats[2] + w_neg * stats[3])
    if not binary_labels:
        loss = loss - stats[4]           # "other" label values keep weight=label
    return loss / denom


if __name__ == "__main__":
    key = jax.random.PRNGKey(0)
    k1, k2, k3, k4 = jax.random.split(key, 4)

    # Edge-detection-like NCHW shape: [2, 4, 16, 16] = 2048 elements
    # (large enough to exercise the Pallas path, not the tiny-input fallback).
    shape = (2, 4, 16, 16)
    pred = jax.random.uniform(k1, shape, jnp.float32, minval=1e-4, maxval=1.0 - 1e-4)
    label = (jax.random.uniform(k2, shape) > 0.8).astype(jnp.float32)

    out = jax.block_until_ready(weighted_edge_loss(pred, label, beta_1=1.0, beta_2=1.0))
    ref = jax.block_until_ready(_weighted_edge_loss_ref(pred, label, 1.0, 1.0))
    assert jnp.allclose(out, ref, rtol=1e-5, atol=1e-6), (out, ref)

    # Binary fast path (drops the "other"-label statistics and the neg count).
    out_b = jax.block_until_ready(weighted_edge_loss(pred, label, binary_labels=True))
    assert jnp.allclose(out_b, ref, rtol=1e-5, atol=1e-6), (out_b, ref)

    # Misaligned element count (1323 % 128 != 0): exercises the masked tail block.
    shape2 = (3, 1, 21, 21)
    pred2 = jax.random.uniform(k3, shape2, jnp.float32, minval=1e-4, maxval=1.0 - 1e-4)
    label2 = (jax.random.uniform(k4, shape2) > 0.7).astype(jnp.float32)
    out2 = jax.block_until_ready(weighted_edge_loss(pred2, label2))
    ref2 = jax.block_until_ready(_weighted_edge_loss_ref(pred2, label2))
    assert jnp.allclose(out2, ref2, rtol=1e-5, atol=1e-6), (out2, ref2)

    # Native bf16 pred streamed without any wrapper upcast pass.
    pred_bf16 = pred.astype(jnp.bfloat16)
    out3 = jax.block_until_ready(weighted_edge_loss(pred_bf16, label))
    ref3 = jax.block_until_ready(_weighted_edge_loss_ref(pred_bf16, label))
    assert jnp.allclose(out3, ref3, rtol=1e-5, atol=1e-6), (out3, ref3)

    print("KERNEL_OK")
</pallas_src>

<mosaic_0001>
module attributes {stable_mosaic.version = 11 : i64} {
  func.func @_wbce_stats_kernel(%arg0: i32, %arg1: i32, %arg2: memref<16x128xf32, #tpu.memory_space<vmem>>, %arg3: memref<16x128xf32, #tpu.memory_space<vmem>>, %arg4: memref<1x5x8x128xf32, #tpu.memory_space<vmem>>) attributes {dimension_semantics = [#tpu.dimension_semantics<parallel>, #tpu.dimension_semantics<arbitrary>], iteration_bounds = array<i64: 1, 1>, scalar_prefetch = 0 : i64, scratch_operands = 0 : i64, tpu.core_type = #tpu.core_type<tc>, window_params = [{transform_indices = @transform_0, window_bounds = array<i64: 16, 128>}, {transform_indices = @transform_1, window_bounds = array<i64: 16, 128>}, {transform_indices = @transform_2, window_bounds = array<i64: 1, 5, 8, 128>}]} {
    %c1_i32 = arith.constant 1 : i32
    %0 = arith.muli %arg0, %c1_i32 : i32
    %1 = arith.addi %0, %arg1 : i32
    %c0_i32 = arith.constant 0 : i32
    %2 = arith.cmpi eq, %arg1, %c0_i32 : i32
    %3 = arith.extui %2 : i1 to i32
    %c0_i32_0 = arith.constant 0 : i32
    %4 = arith.cmpi ne, %3, %c0_i32_0 : i32
    scf.if %4 {
      %cst = arith.constant 0.000000e+00 : f32
      %8 = vector.broadcast %cst : f32 to vector<5x8x128xf32>
      %c0 = arith.constant 0 : index
      %c0_3 = arith.constant 0 : index
      %c0_4 = arith.constant 0 : index
      %c0_5 = arith.constant 0 : index
      %9 = vector.load %arg4[%c0, %c0_3, %c0_4, %c0_5] : memref<1x5x8x128xf32, #tpu.memory_space<vmem>>, vector<1x5x8x128xf32>
      %10 = vector.shape_cast %9 : vector<1x5x8x128xf32> to vector<5x8x128xf32>
      %11 = vector.shape_cast %8 : vector<5x8x128xf32> to vector<1x5x8x128xf32>
      tpu.vector_store %arg4[%c0, %c0_3, %c0_4, %c0_5], %11 {strides = array<i32>} : memref<1x5x8x128xf32, #tpu.memory_space<vmem>>, vector<1x5x8x128xf32>,
    } else {
    }
    %c0_i32_1 = arith.constant 0 : i32
    %5 = arith.cmpi sle, %1, %c0_i32_1 : i32
    %6 = arith.extui %5 : i1 to i32
    %c0_i32_2 = arith.constant 0 : i32
    %7 = arith.cmpi ne, %6, %c0_i32_2 : i32
    scf.if %7 {
      %c0 = arith.constant 0 : index
      %c0_3 = arith.constant 0 : index
      %8 = vector.load %arg2[%c0, %c0_3] : memref<16x128xf32, #tpu.memory_space<vmem>>, vector<16x128xf32>
      %c0_4 = arith.constant 0 : index
      %c0_5 = arith.constant 0 : index
      %9 = vector.load %arg3[%c0_4, %c0_5] : memref<16x128xf32, #tpu.memory_space<vmem>>, vector<16x128xf32>
      %10 = arith.fptosi %9 : vector<16x128xf32> to vector<16x128xi32>
      %11 = arith.sitofp %10 : vector<16x128xi32> to vector<16x128xf32>
      %cst = arith.constant 1.000000e+00 : f32
      %12 = vector.broadcast %cst : f32 to vector<16x128xf32>
      %13 = arith.cmpf oeq, %11, %12 : vector<16x128xf32>
      %14 = arith.extui %13 : vector<16x128xi1> to vector<16x128xi32>
      %15 = arith.sitofp %14 : vector<16x128xi32> to vector<16x128xf32>
      %cst_6 = arith.constant 0.000000e+00 : f32
      %16 = vector.broadcast %cst_6 : f32 to vector<16x128xf32>
      %17 = arith.cmpf oeq, %11, %16 : vector<16x128xf32>
      %18 = arith.extui %17 : vector<16x128xi1> to vector<16x128xi32>
      %19 = arith.sitofp %18 : vector<16x128xi32> to vector<16x128xf32>
      %cst_7 = arith.constant 1.000000e+00 : f32
      %20 = vector.broadcast %cst_7 : f32 to vector<16x128xf32>
      %21 = arith.subf %20, %15 : vector<16x128xf32>
      %22 = arith.subf %21, %19 : vector<16x128xf32>
      %23 = math.log %8 : vector<16x128xf32>
      %cst_8 = arith.constant -1.000000e+02 : f32
      %24 = vector.broadcast %cst_8 : f32 to vector<16x128xf32>
      %25 = arith.maximumf %23, %24 : vector<16x128xf32>
      %cst_9 = arith.constant 1.000000e+00 : f32
      %26 = vector.broadcast %cst_9 : f32 to vector<16x128xf32>
      %27 = arith.subf %26, %8 : vector<16x128xf32>
      %28 = math.log %27 : vector<16x128xf32>
      %cst_10 = arith.constant -1.000000e+02 : f32
      %29 = vector.broadcast %cst_10 : f32 to vector<16x128xf32>
      %30 = arith.maximumf %28, %29 : vector<16x128xf32>
      %c0_11 = arith.constant 0 : index
      %c0_12 = arith.constant 0 : index
      %c0_13 = arith.constant 0 : index
      %c0_14 = arith.constant 0 : index
      %31 = vector.load %arg4[%c0_11, %c0_12, %c0_13, %c0_14] : memref<1x5x8x128xf32, #tpu.memory_space<vmem>>, vector<1x1x8x128xf32>
      %32 = vector.shape_cast %31 : vector<1x1x8x128xf32> to vector<8x128xf32>
      %33 = vector.shape_cast %15 : vector<16x128xf32> to vector<2x8x128xf32>
      %cst_15 = arith.constant dense<0.000000e+00> : vector<8x128xf32>
      %34 = vector.multi_reduction <add>, %33, %cst_15 [0] : vector<2x8x128xf32> to vector<8x128xf32>
      %35 = arith.addf %32, %34 : vector<8x128xf32>
      %c0_16 = arith.constant 0 : index
      %c0_17 = arith.constant 0 : index
      %c0_18 = arith.constant 0 : index
      %c0_19 = arith.constant 0 : index
      %36 = vector.load %arg4[%c0_16, %c0_17, %c0_18, %c0_19] : memref<1x5x8x128xf32, #tpu.memory_space<vmem>>, vector<1x1x8x128xf32>
      %37 = vector.shape_cast %36 : vector<1x1x8x128xf32> to vector<8x128xf32>
      %38 = vector.shape_cast %35 : vector<8x128xf32> to vector<1x1x8x128xf32>
      tpu.vector_store %arg4[%c0_16, %c0_17, %c0_18, %c0_19], %38 {strides = array<i32>} : memref<1x5x8x128xf32, #tpu.memory_space<vmem>>, vector<1x1x8x128xf32>,
      %c0_20 = arith.constant 0 : index
      %c2 = arith.constant 2 : index
      %c0_21 = arith.constant 0 : index
      %c0_22 = arith.constant 0 : index
      %39 = vector.load %arg4[%c0_20, %c2, %c0_21, %c0_22] : memref<1x5x8x128xf32, #tpu.memory_space<vmem>>, vector<1x1x8x128xf32>
      %40 = vector.shape_cast %39 : vector<1x1x8x128xf32> to vector<8x128xf32>
      %41 = arith.mulf %15, %25 : vector<16x128xf32>
      %42 = vector.shape_cast %41 : vector<16x128xf32> to vector<2x8x128xf32>
      %cst_23 = arith.constant dense<0.000000e+00> : vector<8x128xf32>
      %43 = vector.multi_reduction <add>, %42, %cst_23 [0] : vector<2x8x128xf32> to vector<8x128xf32>
      %44 = arith.addf %40, %43 : vector<8x128xf32>
      %c0_24 = arith.constant 0 : index
      %c2_25 = arith.constant 2 : index
      %c0_26 = arith.constant 0 : index
      %c0_27 = arith.constant 0 : index
      %45 = vector.load %arg4[%c0_24, %c2_25, %c0_26, %c0_27] : memref<1x5x8x128xf32, #tpu.memory_space<vmem>>, vector<1x1x8x128xf32>
      %46 = vector.shape_cast %45 : vector<1x1x8x128xf32> to vector<8x128xf32>
      %47 = vector.shape_cast %44 : vector<8x128xf32> to vector<1x1x8x128xf32>
      tpu.vector_store %arg4[%c0_24, %c2_25, %c0_26, %c0_27], %47 {strides = array<i32>} : memref<1x5x8x128xf32, #tpu.memory_space<vmem>>, vector<1x1x8x128xf32>,
      %c0_28 = arith.constant 0 : index
      %c3 = arith.constant 3 : index
      %c0_29 = arith.constant 0 : index
      %c0_30 = arith.constant 0 : index
      %48 = vector.load %arg4[%c0_28, %c3, %c0_29, %c0_30] : memref<1x5x8x128xf32, #tpu.memory_space<vmem>>, vector<1x1x8x128xf32>
      %49 = vector.shape_cast %48 : vector<1x1x8x128xf32> to vector<8x128xf32>
      %50 = arith.mulf %19, %30 : vector<16x128xf32>
      %51 = vector.shape_cast %50 : vector<16x128xf32> to vector<2x8x128xf32>
      %cst_31 = arith.constant dense<0.000000e+00> : vector<8x128xf32>
      %52 = vector.multi_reduction <add>, %51, %cst_31 [0] : vector<2x8x128xf32> to vector<8x128xf32>
      %53 = arith.addf %49, %52 : vector<8x128xf32>
      %c0_32 = arith.constant 0 : index
      %c3_33 = arith.constant 3 : index
      %c0_34 = arith.constant 0 : index
      %c0_35 = arith.constant 0 : index
      %54 = vector.load %arg4[%c0_32, %c3_33, %c0_34, %c0_35] : memref<1x5x8x128xf32, #tpu.memory_space<vmem>>, vector<1x1x8x128xf32>
      %55 = vector.shape_cast %54 : vector<1x1x8x128xf32> to vector<8x128xf32>
      %56 = vector.shape_cast %53 : vector<8x128xf32> to vector<1x1x8x128xf32>
      tpu.vector_store %arg4[%c0_32, %c3_33, %c0_34, %c0_35], %56 {strides = array<i32>} : memref<1x5x8x128xf32, #tpu.memory_space<vmem>>, vector<1x1x8x128xf32>,
      %c0_36 = arith.constant 0 : index
      %c1 = arith.constant 1 : index
      %c0_37 = arith.constant 0 : index
      %c0_38 = arith.constant 0 : index
      %57 = vector.load %arg4[%c0_36, %c1, %c0_37, %c0_38] : memref<1x5x8x128xf32, #tpu.memory_space<vmem>>, vector<1x1x8x128xf32>
      %58 = vector.shape_cast %57 : vector<1x1x8x128xf32> to vector<8x128xf32>
      %59 = vector.shape_cast %19 : vector<16x128xf32> to vector<2x8x128xf32>
      %cst_39 = arith.constant dense<0.000000e+00> : vector<8x128xf32>
      %60 = vector.multi_reduction <add>, %59, %cst_39 [0] : vector<2x8x128xf32> to vector<8x128xf32>
      %61 = arith.addf %58, %60 : vector<8x128xf32>
      %c0_40 = arith.constant 0 : index
      %c1_41 = arith.constant 1 : index
      %c0_42 = arith.constant 0 : index
      %c0_43 = arith.constant 0 : index
      %62 = vector.load %arg4[%c0_40, %c1_41, %c0_42, %c0_43] : memref<1x5x8x128xf32, #tpu.memory_space<vmem>>, vector<1x1x8x128xf32>
      %63 = vector.shape_cast %62 : vector<1x1x8x128xf32> to vector<8x128xf32>
      %64 = vector.shape_cast %61 : vector<8x128xf32> to vector<1x1x8x128xf32>
      tpu.vector_store %arg4[%c0_40, %c1_41, %c0_42, %c0_43], %64 {strides = array<i32>} : memref<1x5x8x128xf32, #tpu.memory_space<vmem>>, vector<1x1x8x128xf32>,
      %c0_44 = arith.constant 0 : index
      %c4 = arith.constant 4 : index
      %c0_45 = arith.constant 0 : index
      %c0_46 = arith.constant 0 : index
      %65 = vector.load %arg4[%c0_44, %c4, %c0_45, %c0_46] : memref<1x5x8x128xf32, #tpu.memory_space<vmem>>, vector<1x1x8x128xf32>
      %66 = vector.shape_cast %65 : vector<1x1x8x128xf32> to vector<8x128xf32>
      %67 = arith.mulf %22, %11 : vector<16x128xf32>
      %68 = arith.mulf %11, %25 : vector<16x128xf32>
      %cst_47 = arith.constant 1.000000e+00 : f32
      %69 = vector.broadcast %cst_47 : f32 to vector<16x128xf32>
      %70 = arith.subf %69, %11 : vector<16x128xf32>
      %71 = arith.mulf %70, %30 : vector<16x128xf32>
      %72 = arith.addf %68, %71 : vector<16x128xf32>
      %73 = arith.mulf %67, %72 : vector<16x128xf32>
      %74 = vector.shape_cast %73 : vector<16x128xf32> to vector<2x8x128xf32>
      %cst_48 = arith.constant dense<0.000000e+00> : vector<8x128xf32>
      %75 = vector.multi_reduction <add>, %74, %cst_48 [0] : vector<2x8x128xf32> to vector<8x128xf32>
      %76 = arith.addf %66, %75 : vector<8x128xf32>
      %c0_49 = arith.constant 0 : index
      %c4_50 = arith.constant 4 : index
      %c0_51 = arith.constant 0 : index
      %c0_52 = arith.constant 0 : index
      %77 = vector.load %arg4[%c0_49, %c4_50, %c0_51, %c0_52] : memref<1x5x8x128xf32, #tpu.memory_space<vmem>>, vector<1x1x8x128xf32>
      %78 = vector.shape_cast %77 : vector<1x1x8x128xf32> to vector<8x128xf32>
      %79 = vector.shape_cast %76 : vector<8x128xf32> to vector<1x1x8x128xf32>
      tpu.vector_store %arg4[%c0_49, %c4_50, %c0_51, %c0_52], %79 {strides = array<i32>} : memref<1x5x8x128xf32, #tpu.memory_space<vmem>>, vector<1x1x8x128xf32>,
    } else {
    }
    return
  }
  func.func @transform_0(%arg0: i32, %arg1: i32) -> (i32, i32) {
    %c1_i32 = arith.constant 1 : i32
    %0 = arith.muli %arg0, %c1_i32 : i32
    %1 = arith.addi %0, %arg1 : i32
    %c0_i32 = arith.constant 0 : i32
    %2 = arith.minsi %1, %c0_i32 : i32
    %c0_i32_0 = arith.constant 0 : i32
    %c0_i32_1 = arith.constant 0 : i32
    return %2, %c0_i32_0 : i32, i32
  }
  func.func @transform_1(%arg0: i32, %arg1: i32) -> (i32, i32) {
    %c1_i32 = arith.constant 1 : i32
    %0 = arith.muli %arg0, %c1_i32 : i32
    %1 = arith.addi %0, %arg1 : i32
    %c0_i32 = arith.constant 0 : i32
    %2 = arith.minsi %1, %c0_i32 : i32
    %c0_i32_0 = arith.constant 0 : i32
    %c0_i32_1 = arith.constant 0 : i32
    return %2, %c0_i32_0 : i32, i32
  }
  func.func @transform_2(%arg0: i32, %arg1: i32) -> (i32, i32, i32, i32) {
    %c0_i32 = arith.constant 0 : i32
    %c0_i32_0 = arith.constant 0 : i32
    %c0_i32_1 = arith.constant 0 : i32
    %c0_i32_2 = arith.constant 0 : i32
    return %arg0, %c0_i32, %c0_i32_0, %c0_i32_1 : i32, i32, i32, i32
  }
}

</mosaic_0001>

<llo_original>
// kernel: weighted_edge_loss.1
$region0: #{weighted_edge_loss.1}
  #allocation0 [shape = 'u32[]', space=smem, size = 0x4, offset = 0x4, fixed_abs, tag = 'smem constant byte address 0x4 - core index']
  #allocation1 [shape = 'u32[144,128]{1,0:T(1,128)}', space=vmem, size = 0x12000, scoped, tag = 'internal scratch']
  %s0 = inlined_call_operand.vmem [shape: f32[16,128], index: 0, kind: input, shape index: {}]
  %s1 = inlined_call_operand.vmem [shape: f32[16,128], index: 1, kind: input, shape index: {}]
  %s2 = inlined_call_operand.vmem [shape: f32[1,5,8,128], index: 2, kind: output, shape index: {}]
  %s3 = sld [smem:[#allocation0]]
  $region26: #{weighted_edge_loss.1} parent=0
    _
  %s5 = ssub.s32 1, %s3
  %s6 = scalar_select 0, %s5, %s3
  // Predicated region
  $region2: #{weighted_edge_loss.1} parent=0 // pred_check
    _
  $region3: #{weighted_edge_loss.1} parent=0 // pred_check_branch
    %8 = sbr.rel (0) target = $region5
  $region4: #{weighted_edge_loss.1} parent=0 // pred_region
    %s9 = sadd.s32 0, 0
    %p10 = scmp.lt.s32.totalorder %s9, 0
    %s11 = scalar_select %p10, %s9, 0
    %s12 = smul.u32 2, %s11
    %p13 = scmp.lt.s32.totalorder %s12, 1
    %s14 = scalar_select %p13, %s12, 1
    %s15 = smul.addr %s14, 8
    %s16 = scalar_lea.vmem %s0, %s15
    %s17 = sadd.s32 0, 0
    %p18 = scmp.lt.s32.totalorder %s17, 0
    %s19 = scalar_select %p18, %s17, 0
    %s20 = smul.u32 2, %s19
  $region5: #{weighted_edge_loss.1} parent=0 // pred_fallthru
    _
  // Predicated region
  $region6: #{weighted_edge_loss.1} parent=0 // pred_check
    _
  $region7: #{weighted_edge_loss.1} parent=0 // pred_check_branch
    %22 = sbr.rel (0) target = $region9
  $region8: #{weighted_edge_loss.1} parent=0 // pred_region
    %s23 = sadd.s32 0, 0
    %p24 = scmp.lt.s32.totalorder %s23, 0
    %s25 = scalar_select %p24, %s23, 0
    %s26 = smul.u32 2, %s25
    %p27 = scmp.lt.s32.totalorder %s26, 1
    %s28 = scalar_select %p27, %s26, 1
    %s29 = smul.addr %s28, 8
    %s30 = scalar_lea.vmem %s1, %s29
    %s31 = sadd.s32 0, 0
    %p32 = scmp.lt.s32.totalorder %s31, 0
    %s33 = scalar_select %p32, %s31, 0
    %s34 = smul.u32 2, %s33
  $region9: #{weighted_edge_loss.1} parent=0 // pred_fallthru
    _
  %s35 = sadd.s32 0, 0
  %p36 = scmp.lt.s32.totalorder %s35, 0
  %s37 = scalar_select %p36, %s35, 0
  %s38 = smul.u32 2, %s37
  %p39 = scmp.lt.s32.totalorder %s38, 1
  %s40 = scalar_select %p39, %s38, 1
  %s41 = smul.addr %s40, 8
  %s42 = scalar_lea.vmem %s0, %s41
  %s43 = sadd.s32 0, 0
  %p44 = scmp.lt.s32.totalorder %s43, 0
  %s45 = scalar_select %p44, %s43, 0
  %s46 = smul.u32 2, %s45
  %p47 = scmp.lt.s32.totalorder %s46, 1
  %s48 = scalar_select %p47, %s46, 1
  %s49 = smul.addr %s48, 8
  %s50 = scalar_lea.vmem %s1, %s49
  %s51 = sadd.s32 0, 0
  %p52 = scmp.lt.s32.totalorder %s51, 0
  %s53 = scalar_select %p52, %s51, 0
  %s54 = smul.u32 2, %s53
  %p55 = scmp.lt.s32.totalorder %s54, 1
  %s56 = scalar_select %p55, %s54, 1
  %s57 = smul.addr %s56, 8
  %s58 = scalar_lea.vmem %s0, %s57
  %s59 = sadd.s32 0, 0
  %p60 = scmp.lt.s32.totalorder %s59, 0
  %s61 = scalar_select %p60, %s59, 0
  %s62 = smul.u32 2, %s61
  %s63 = sadd.s32 0, 0
  %p64 = scmp.lt.s32.totalorder %s63, 0
  %s65 = scalar_select %p64, %s63, 0
  %s66 = smul.u32 2, %s65
  %p67 = scmp.lt.s32.totalorder %s66, 1
  %s68 = scalar_select %p67, %s66, 1
  %s69 = smul.addr %s68, 8
  %s70 = scalar_lea.vmem %s1, %s69
  %s71 = sadd.s32 0, 0
  %p72 = scmp.lt.s32.totalorder %s71, 0
  %s73 = scalar_select %p72, %s71, 0
  %s74 = smul.u32 2, %s73
  %s75 = sadd.s32 0, 0
  %p76 = scmp.eq.s32.totalorder 0, 0
  // Predicated region
  $region10: #{weighted_edge_loss.1} parent=0 // pred_check
    %p77 = pneg %p76
  $region11: #{weighted_edge_loss.1} parent=0 // pred_check_branch
    %79 = sbr.rel (%p77) target = $region13
  $region12: #{weighted_edge_loss.1} parent=0 // pred_region
    %80 = vst [vmem:[%s2] sm:$0xff] 0.0
    %81 = vst [vmem:[%s2 + $0x8] sm:$0xff] 0.0
    %82 = vst [vmem:[%s2 + $0x10] sm:$0xff] 0.0
    %83 = vst [vmem:[%s2 + $0x18] sm:$0xff] 0.0
    %84 = vst [vmem:[%s2 + $0x20] sm:$0xff] 0.0
  $region13: #{weighted_edge_loss.1} parent=0 // pred_fallthru
    _
  %p85 = scmp.le.s32.totalorder %s75, 0
  // Predicated region
  $region14: #{weighted_edge_loss.1} parent=0 // pred_check
    %p86 = pneg %p85
  $region15: #{weighted_edge_loss.1} parent=0 // pred_check_branch
    %88 = sbr.rel (%p86) target = $region17
  $region16: #{weighted_edge_loss.1} parent=0 // pred_region
    %v89 = vld [vmem:[%s58] sm:$0xff]
    %v90 = vld [vmem:[%s58 + $0x8] sm:$0xff]
    %v91 = vld [vmem:[%s70] sm:$0xff]
    %v92 = vld [vmem:[%s70 + $0x8] sm:$0xff]
    %v93 = vcvt.f32.s32.to.zero.pseudo %v91
    %v94 = vcvt.f32.s32.to.zero.pseudo %v92
    %v95 = vcvt.s32.f32 %v93
    %v96 = vcvt.s32.f32 %v94
    %vm97 = vcmp.eq.f32.partialorder %v95, 1.0
    %vm98 = vcmp.eq.f32.partialorder %v96, 1.0
    %v99 = vsel %vm97, 1, 0
    %v100 = vsel %vm98, 1, 0
    %v101 = vcvt.s32.f32 %v99
    %v102 = vcvt.s32.f32 %v100
    %vm103 = vcmp.eq.f32.partialorder %v95, 0.0
    %vm104 = vcmp.eq.f32.partialorder %v96, 0.0
    %v105 = vsel %vm103, 1, 0
    %v106 = vsel %vm104, 1, 0
    %v107 = vcvt.s32.f32 %v105
    %v108 = vcvt.s32.f32 %v106
    %v109 = vsub.f32 1.0, %v101
    %v110 = vsub.f32 1.0, %v102
    %v111 = vsub.f32 %v109, %v107
    %v112 = vsub.f32 %v110, %v108
    %v113 = vlog2.pop %v89
    %v114 = vmul.f32 %v113, 0.6931472
    %v115 = vlog2.pop %v90
    %v116 = vmul.f32 %v115, 0.6931472
    %v117 = vmax.f32 %v114, -100.0
    %v118 = vmax.f32 %v116, -100.0
    %v119 = vsub.f32 1.0, %v89
    %v120 = vsub.f32 1.0, %v90
    %v121 = vlog2.pop %v119
    %v122 = vmul.f32 %v121, 0.6931472
    %v123 = vlog2.pop %v120
    %v124 = vmul.f32 %v123, 0.6931472
    %v125 = vmax.f32 %v122, -100.0
    %v126 = vmax.f32 %v124, -100.0
    %v127 = vld [vmem:[%s2] sm:$0xff]
    %v128 = vadd.f32 %v101, %v102
    %v129 = vadd.f32 %v127, %v128
    %130 = vst [vmem:[%s2] sm:$0xff] %v129
    %s131 = scalar_lea.vmem %s2, 16
    %v132 = vld [vmem:[%s131] sm:$0xff]
    %v133 = vmul.f32 %v101, %v117
    %v134 = vmul.f32 %v102, %v118
    %v135 = vadd.f32 %v133, %v134
    %v136 = vadd.f32 %v132, %v135
    %137 = vst [vmem:[%s131] sm:$0xff] %v136
    %s138 = scalar_lea.vmem %s2, 24
    %v139 = vld [vmem:[%s138] sm:$0xff]
    %v140 = vmul.f32 %v107, %v125
    %v141 = vmul.f32 %v108, %v126
    %v142 = vadd.f32 %v140, %v141
    %v143 = vadd.f32 %v139, %v142
    %144 = vst [vmem:[%s138] sm:$0xff] %v143
    %s145 = scalar_lea.vmem %s2, 8
    %v146 = vld [vmem:[%s145] sm:$0xff]
    %v147 = vadd.f32 %v107, %v108
    %v148 = vadd.f32 %v146, %v147
    %149 = vst [vmem:[%s145] sm:$0xff] %v148
    %s150 = scalar_lea.vmem %s2, 32
    %v151 = vld [vmem:[%s150] sm:$0xff]
    %v152 = vmul.f32 %v111, %v95
    %v153 = vmul.f32 %v112, %v96
    %v154 = vmul.f32 %v95, %v117
    %v155 = vmul.f32 %v96, %v118
    %v156 = vsub.f32 1.0, %v95
    %v157 = vsub.f32 1.0, %v96
    %v158 = vmul.f32 %v156, %v125
    %v159 = vmul.f32 %v157, %v126
    %v160 = vadd.f32 %v154, %v158
    %v161 = vadd.f32 %v155, %v159
    %v162 = vmul.f32 %v152, %v160
    %v163 = vmul.f32 %v153, %v161
    %v164 = vadd.f32 %v162, %v163
    %v165 = vadd.f32 %v151, %v164
    %166 = vst [vmem:[%s150] sm:$0xff] %v165
  $region17: #{weighted_edge_loss.1} parent=0 // pred_fallthru
    _
  // Predicated region
  $region18: #{weighted_edge_loss.1} parent=0 // pred_check
    _
  $region19: #{weighted_edge_loss.1} parent=0 // pred_check_branch
    %168 = sbr.rel (0) target = $region21
  $region20: #{weighted_edge_loss.1} parent=0 // pred_region
    _
  $region21: #{weighted_edge_loss.1} parent=0 // pred_fallthru
    _
  // Predicated region
  $region22: #{weighted_edge_loss.1} parent=0 // pred_check
    _
  $region23: #{weighted_edge_loss.1} parent=0 // pred_check_branch
    %170 = sbr.rel (0) target = $region25
  $region24: #{weighted_edge_loss.1} parent=0 // pred_region
    _
  $region25: #{weighted_edge_loss.1} parent=0 // pred_fallthru
    _

</llo_original>
